<compile_context>
chip_gen: v7x
topology: tpu7x:2x2x1
jax: 0.10.0
libtpu: 0.0.40
codegen_flags: <defaults>
</compile_context>

<pallas_src>
import jax
import jax.numpy as jnp
from jax.experimental import pallas as pl
from jax.experimental.pallas import tpu as pltpu


# ----------------------------------------------------------------------------
# Plain-JAX glue (tiny, one-shot): A_norm = D^{-1/2} (A + I) D^{-1/2}
# ----------------------------------------------------------------------------
def normalize_adj(A):
    I = jnp.eye(A.shape[0], dtype=A.dtype)
    A_hat = A + I
    D = jnp.sum(A_hat, axis=1)
    D_inv_sqrt = jnp.diag(jnp.power(D, -0.5))
    return D_inv_sqrt @ A_hat @ D_inv_sqrt


def _round_up(x, m):
    return ((x + m - 1) // m) * m


# ----------------------------------------------------------------------------
# Tiled matmul kernels: C[M,N] = A[M,K] @ B[K,N], f32 accumulation on MXU.
# ----------------------------------------------------------------------------
def _matmul_kernel(a_ref, b_ref, o_ref, acc_ref):
    # K (reduction) is the last grid axis; accumulate in resident f32 scratch.
    @pl.when(pl.program_id(2) == 0)
    def _():
        acc_ref[...] = jnp.zeros_like(acc_ref)

    acc_ref[...] += jnp.dot(
        a_ref[...], b_ref[...], preferred_element_type=jnp.float32
    )

    @pl.when(pl.program_id(2) == pl.num_programs(2) - 1)
    def _():
        o_ref[...] = acc_ref[...].astype(o_ref.dtype)


def _matmul_kernel_single_k(a_ref, b_ref, o_ref):
    # Whole reduction fits in one tile: no scratch accumulator, no branches.
    o_ref[...] = jnp.dot(
        a_ref[...], b_ref[...], preferred_element_type=jnp.float32
    ).astype(o_ref.dtype)


def matmul_pallas(a, b, *, tm=256, tn=256, tk=256,
                  out_dtype=None, compute_dtype=jnp.bfloat16):
    """Tiled, pipelined MXU matmul. Pads to tile multiples only when needed.

    256^2 tiles keep the double-buffered VMEM footprint at ~1.3 MiB — far
    below the scoped limit on v5e/v6e/v7x — while keeping output stores
    lane-dense (last dim a multiple of 128).
    """
    M, K = a.shape
    K2, N = b.shape
    assert K == K2, (a.shape, b.shape)
    out_dtype = jnp.dtype(out_dtype) if out_dtype is not None else jnp.dtype(a.dtype)

    # Clamp tiles: rows to a multiple of 8 (sublane), cols/K to 128 (lane).
    tm = min(tm, _round_up(M, 8))
    tn = min(tn, _round_up(N, 128))
    tk = min(tk, _round_up(K, 128))

    Mp, Np, Kp = _round_up(M, tm), _round_up(N, tn), _round_up(K, tk)

    a_c = a.astype(compute_dtype)
    b_c = b.astype(compute_dtype)
    if (Mp, Kp) != (M, K):
        a_c = jnp.pad(a_c, ((0, Mp - M), (0, Kp - K)))
    if (Kp, Np) != (K, N):
        b_c = jnp.pad(b_c, ((0, Kp - K), (0, Np - N)))

    gm, gn, gk = Mp // tm, Np // tn, Kp // tk

    flops = 2 * Mp * Np * Kp
    bytes_accessed = (
        (Mp * Kp + Kp * Np) * jnp.dtype(compute_dtype).itemsize
        + Mp * Np * out_dtype.itemsize
    )
    cost = pl.CostEstimate(
        flops=flops, transcendentals=0, bytes_accessed=bytes_accessed
    )

    if gk == 1:
        out_p = pl.pallas_call(
            _matmul_kernel_single_k,
            out_shape=jax.ShapeDtypeStruct((Mp, Np), out_dtype),
            grid_spec=pltpu.PrefetchScalarGridSpec(
                num_scalar_prefetch=0,
                grid=(gm, gn),
                in_specs=[
                    pl.BlockSpec((tm, Kp), lambda i, j: (i, 0)),
                    pl.BlockSpec((Kp, tn), lambda i, j: (0, j)),
                ],
                out_specs=pl.BlockSpec((tm, tn), lambda i, j: (i, j)),
            ),
            compiler_params=pltpu.CompilerParams(
                dimension_semantics=("parallel", "parallel"),
                vmem_limit_bytes=48 * 1024 * 1024,
            ),
            cost_estimate=cost,
        )(a_c, b_c)
    else:
        out_p = pl.pallas_call(
            _matmul_kernel,
            out_shape=jax.ShapeDtypeStruct((Mp, Np), out_dtype),
            grid_spec=pltpu.PrefetchScalarGridSpec(
                num_scalar_prefetch=0,
                grid=(gm, gn, gk),
                in_specs=[
                    pl.BlockSpec((tm, tk), lambda i, j, k: (i, k)),
                    pl.BlockSpec((tk, tn), lambda i, j, k: (k, j)),
                ],
                out_specs=pl.BlockSpec((tm, tn), lambda i, j, k: (i, j)),
                scratch_shapes=[pltpu.VMEM((tm, tn), jnp.float32)],
            ),
            compiler_params=pltpu.CompilerParams(
                dimension_semantics=("parallel", "parallel", "arbitrary"),
                vmem_limit_bytes=48 * 1024 * 1024,
            ),
            cost_estimate=cost,
        )(a_c, b_c)

    if (Mp, Np) != (M, N):
        out_p = out_p[:M, :N]
    return out_p


# ----------------------------------------------------------------------------
# GCN forward: H' = A_norm @ (X @ W)
# ----------------------------------------------------------------------------
def gcn_layer(x, weight, a_norm, *, compute_dtype=jnp.bfloat16):
    # 1) support = X @ W — computed once, stored directly as bf16 (the second
    #    matmul would cast to bf16 anyway, so this halves the intermediate HBM
    #    round-trip at zero accuracy cost).
    support = matmul_pallas(
        x, weight, out_dtype=compute_dtype, compute_dtype=compute_dtype
    )
    # 2) out = A_norm @ support — stream A tiles against the small support.
    out = matmul_pallas(
        a_norm, support, out_dtype=x.dtype, compute_dtype=compute_dtype
    )
    return out


gcn_forward = jax.jit(gcn_layer)


def xavier_uniform(key, in_features, out_features, dtype=jnp.float32):
    # Matches nn.init.xavier_uniform_ for a 2-D (in, out) weight.
    bound = (6.0 / (in_features + out_features)) ** 0.5
    return jax.random.uniform(
        key, (in_features, out_features), dtype=dtype, minval=-bound, maxval=bound
    )


if __name__ == "__main__":
    key = jax.random.PRNGKey(0)
    k_x, k_w, k_a, k_x2, k_w2 = jax.random.split(key, 5)

    # ---- Case 1: the module's fixed 4-node graph (exercises single-K path) --
    A = jnp.array(
        [[0, 1, 0, 1],
         [1, 0, 1, 0],
         [0, 1, 0, 1],
         [1, 0, 1, 0]],
        dtype=jnp.float32,
    )
    A_norm = normalize_adj(A)

    N = 4
    in_features = 32
    out_features = 16
    x = jax.random.normal(k_x, (N, in_features), dtype=jnp.float32)
    weight = xavier_uniform(k_w, in_features, out_features)

    out = jax.block_until_ready(gcn_forward(x, weight, A_norm))
    ref = A_norm @ (x @ weight)
    assert out.shape == (N, out_features), out.shape
    assert jnp.allclose(out, ref, atol=3e-2, rtol=3e-2), float(
        jnp.max(jnp.abs(out - ref))
    )

    # ---- Case 2: larger random graph (exercises the 3-D grid / K-reduction) -
    N2, in2, out2 = 512, 320, 192
    A_big = (jax.random.uniform(k_a, (N2, N2)) < 0.1).astype(jnp.float32)
    A_big = jnp.maximum(A_big, A_big.T)          # symmetric adjacency
    A_big = A_big * (1.0 - jnp.eye(N2))          # no self-loops (added in norm)
    A_norm2 = normalize_adj(A_big)
    x2 = jax.random.normal(k_x2, (N2, in2), dtype=jnp.float32)
    w2 = xavier_uniform(k_w2, in2, out2)

    out_big = jax.block_until_ready(gcn_forward(x2, w2, A_norm2))
    ref_big = A_norm2 @ (x2 @ w2)
    assert out_big.shape == (N2, out2), out_big.shape
    assert jnp.allclose(out_big, ref_big, atol=3e-2, rtol=3e-2), float(
        jnp.max(jnp.abs(out_big - ref_big))
    )

    print("KERNEL_OK")
</pallas_src>

<mosaic_0001>
module attributes {stable_mosaic.version = 11 : i64} {
  func.func @_matmul_kernel_single_k(%arg0: i32, %arg1: i32, %arg2: memref<8x128xbf16, #tpu.memory_space<vmem>>, %arg3: memref<128x128xbf16, #tpu.memory_space<vmem>>, %arg4: memref<8x128xbf16, #tpu.memory_space<vmem>>) attributes {dimension_semantics = [#tpu.dimension_semantics<parallel>, #tpu.dimension_semantics<parallel>], iteration_bounds = array<i64: 1, 1>, scalar_prefetch = 0 : i64, scratch_operands = 0 : i64, tpu.core_type = #tpu.core_type<tc>, window_params = [{transform_indices = @transform_0, window_bounds = array<i64: 8, 128>}, {transform_indices = @transform_1, window_bounds = array<i64: 128, 128>}, {transform_indices = @transform_2, window_bounds = array<i64: 8, 128>}]} {
    %c0 = arith.constant 0 : index
    %c0_0 = arith.constant 0 : index
    %0 = vector.load %arg2[%c0, %c0_0] : memref<8x128xbf16, #tpu.memory_space<vmem>>, vector<8x128xbf16>
    %c0_1 = arith.constant 0 : index
    %c0_2 = arith.constant 0 : index
    %1 = vector.load %arg3[%c0_1, %c0_2] : memref<128x128xbf16, #tpu.memory_space<vmem>>, vector<128x128xbf16>
    %cst = arith.constant dense<0.000000e+00> : vector<8x128xf32>
    %2 = tpu.matmul %0, %1, %cst {dimension_numbers = #tpu.dot_dimension_numbers<[1], [0], [0], [1], [0, 0, 1, 1], [], []>} : vector<8x128xbf16>, vector<128x128xbf16>, vector<8x128xf32> -> vector<8x128xf32>
    %3 = arith.truncf %2 : vector<8x128xf32> to vector<8x128xbf16>
    %c0_3 = arith.constant 0 : index
    %c0_4 = arith.constant 0 : index
    %4 = vector.load %arg4[%c0_3, %c0_4] : memref<8x128xbf16, #tpu.memory_space<vmem>>, vector<8x128xbf16>
    tpu.vector_store %arg4[%c0_3, %c0_4], %3 {strides = array<i32>} : memref<8x128xbf16, #tpu.memory_space<vmem>>, vector<8x128xbf16>,
    return
  }
  func.func @transform_0(%arg0: i32, %arg1: i32) -> (i32, i32) {
    %c0_i32 = arith.constant 0 : i32
    %c0_i32_0 = arith.constant 0 : i32
    return %arg0, %c0_i32 : i32, i32
  }
  func.func @transform_1(%arg0: i32, %arg1: i32) -> (i32, i32) {
    %c0_i32 = arith.constant 0 : i32
    %c0_i32_0 = arith.constant 0 : i32
    return %c0_i32, %arg1 : i32, i32
  }
  func.func @transform_2(%arg0: i32, %arg1: i32) -> (i32, i32) {
    %c0_i32 = arith.constant 0 : i32
    return %arg0, %arg1 : i32, i32
  }
}

module attributes {stable_mosaic.version = 11 : i64} {
  func.func @_matmul_kernel_single_k(%arg0: i32, %arg1: i32, %arg2: memref<8x128xbf16, #tpu.memory_space<vmem>>, %arg3: memref<128x128xbf16, #tpu.memory_space<vmem>>, %arg4: memref<8x128xf32, #tpu.memory_space<vmem>>) attributes {dimension_semantics = [#tpu.dimension_semantics<parallel>, #tpu.dimension_semantics<parallel>], iteration_bounds = array<i64: 1, 1>, scalar_prefetch = 0 : i64, scratch_operands = 0 : i64, tpu.core_type = #tpu.core_type<tc>, window_params = [{transform_indices = @transform_0, window_bounds = array<i64: 8, 128>}, {transform_indices = @transform_1, window_bounds = array<i64: 128, 128>}, {transform_indices = @transform_2, window_bounds = array<i64: 8, 128>}]} {
    %c0 = arith.constant 0 : index
    %c0_0 = arith.constant 0 : index
    %0 = vector.load %arg2[%c0, %c0_0] : memref<8x128xbf16, #tpu.memory_space<vmem>>, vector<8x128xbf16>
    %c0_1 = arith.constant 0 : index
    %c0_2 = arith.constant 0 : index
    %1 = vector.load %arg3[%c0_1, %c0_2] : memref<128x128xbf16, #tpu.memory_space<vmem>>, vector<128x128xbf16>
    %cst = arith.constant dense<0.000000e+00> : vector<8x128xf32>
    %2 = tpu.matmul %0, %1, %cst {dimension_numbers = #tpu.dot_dimension_numbers<[1], [0], [0], [1], [0, 0, 1, 1], [], []>} : vector<8x128xbf16>, vector<128x128xbf16>, vector<8x128xf32> -> vector<8x128xf32>
    %c0_3 = arith.constant 0 : index
    %c0_4 = arith.constant 0 : index
    %3 = vector.load %arg4[%c0_3, %c0_4] : memref<8x128xf32, #tpu.memory_space<vmem>>, vector<8x128xf32>
    tpu.vector_store %arg4[%c0_3, %c0_4], %2 {strides = array<i32>} : memref<8x128xf32, #tpu.memory_space<vmem>>, vector<8x128xf32>,
    return
  }
  func.func @transform_0(%arg0: i32, %arg1: i32) -> (i32, i32) {
    %c0_i32 = arith.constant 0 : i32
    %c0_i32_0 = arith.constant 0 : i32
    return %arg0, %c0_i32 : i32, i32
  }
  func.func @transform_1(%arg0: i32, %arg1: i32) -> (i32, i32) {
    %c0_i32 = arith.constant 0 : i32
    %c0_i32_0 = arith.constant 0 : i32
    return %c0_i32, %arg1 : i32, i32
  }
  func.func @transform_2(%arg0: i32, %arg1: i32) -> (i32, i32) {
    %c0_i32 = arith.constant 0 : i32
    return %arg0, %arg1 : i32, i32
  }
}

</mosaic_0001>

<llo_original>
// kernel: gcn_layer.2
$region0: #{gcn_layer.2}
  #allocation0 [shape = 'u32[]', space=smem, size = 0x4, offset = 0x4, fixed_abs, tag = 'smem constant byte address 0x4 - core index']
  #allocation1 [shape = 'u32[144,128]{1,0:T(1,128)}', space=vmem, size = 0x12000, scoped, tag = 'internal scratch']
  %s0 = inlined_call_operand.vmem [shape: bf16[8,128], index: 0, kind: input, shape index: {}]
  %s1 = inlined_call_operand.vmem [shape: bf16[128,128], index: 1, kind: input, shape index: {}]
  %s2 = inlined_call_operand.vmem [shape: bf16[8,128], index: 2, kind: output, shape index: {}]
  %s3 = sld [smem:[#allocation0]]
  $region18: #{gcn_layer.2} parent=0
    _
  %s5 = ssub.s32 1, %s3
  %s6 = scalar_select 0, %s5, %s3
  // Predicated region
  $region2: #{gcn_layer.2} parent=0 // pred_check
    _
  $region3: #{gcn_layer.2} parent=0 // pred_check_branch
    %8 = sbr.rel (0) target = $region5
  $region4: #{gcn_layer.2} parent=0 // pred_region
    _
  $region5: #{gcn_layer.2} parent=0 // pred_fallthru
    _
  // Predicated region
  $region6: #{gcn_layer.2} parent=0 // pred_check
    _
  $region7: #{gcn_layer.2} parent=0 // pred_check_branch
    %10 = sbr.rel (0) target = $region9
  $region8: #{gcn_layer.2} parent=0 // pred_region
    _
  $region9: #{gcn_layer.2} parent=0 // pred_fallthru
    _
  %v12 = vld [vmem:[%s0] sm:$0xf]
  %v13 = vld [vmem:[%s1] sm:$0xf]
  %v14 = vld [vmem:[%s1 + $0x4] sm:$0xf]
  %v15 = vld [vmem:[%s1 + $0x8] sm:$0xf]
  %v16 = vld [vmem:[%s1 + $0xc] sm:$0xf]
  %v17 = vld [vmem:[%s1 + $0x10] sm:$0xf]
  %v18 = vld [vmem:[%s1 + $0x14] sm:$0xf]
  %v19 = vld [vmem:[%s1 + $0x18] sm:$0xf]
  %v20 = vld [vmem:[%s1 + $0x1c] sm:$0xf]
  %v21 = vld [vmem:[%s1 + $0x20] sm:$0xf]
  %v22 = vld [vmem:[%s1 + $0x24] sm:$0xf]
  %v23 = vld [vmem:[%s1 + $0x28] sm:$0xf]
  %v24 = vld [vmem:[%s1 + $0x2c] sm:$0xf]
  %v25 = vld [vmem:[%s1 + $0x30] sm:$0xf]
  %v26 = vld [vmem:[%s1 + $0x34] sm:$0xf]
  %v27 = vld [vmem:[%s1 + $0x38] sm:$0xf]
  %v28 = vld [vmem:[%s1 + $0x3c] sm:$0xf]
  %v45 = vunpack.c.l.b16 %v13
  %v46 = vunpack.c.l.b16 %v14
  %v47 = vunpack.c.l.b16 %v15
  %v48 = vunpack.c.l.b16 %v16
  %v49 = vunpack.c.l.b16 %v17
  %v50 = vunpack.c.l.b16 %v18
  %v51 = vunpack.c.l.b16 %v19
  %v52 = vunpack.c.l.b16 %v20
  %v53 = vunpack.c.l.b16 %v21
  %v54 = vunpack.c.l.b16 %v22
  %v55 = vunpack.c.l.b16 %v23
  %v56 = vunpack.c.l.b16 %v24
  %v57 = vunpack.c.l.b16 %v25
  %v58 = vunpack.c.l.b16 %v26
  %v59 = vunpack.c.l.b16 %v27
  %v60 = vunpack.c.l.b16 %v28
  %v61 = vpack.c.b16 %v46, %v45
  %v62 = vpack.c.b16 %v48, %v47
  %v63 = vpack.c.b16 %v50, %v49
  %v64 = vpack.c.b16 %v52, %v51
  %v65 = vpack.c.b16 %v54, %v53
  %v66 = vpack.c.b16 %v56, %v55
  %v67 = vpack.c.b16 %v58, %v57
  %v68 = vpack.c.b16 %v60, %v59
  %77 = vmatprep.subr.bf16.mxu0 0
  %78 = vmatpush1.bf16.msra.mxu0 %v61
  %79 = vmatprep.subr.bf16.mxu0 0
  %80 = vmatpush1.bf16.msra.mxu0 %v62
  %81 = vmatprep.subr.bf16.mxu0 0
  %82 = vmatpush1.bf16.msra.mxu0 %v63
  %83 = vmatprep.subr.bf16.mxu0 0
  %84 = vmatpush1.bf16.msra.mxu0 %v64
  %85 = vmatprep.subr.bf16.mxu0 0
  %86 = vmatpush1.bf16.msra.mxu0 %v65
  %87 = vmatprep.subr.bf16.mxu0 0
  %88 = vmatpush1.bf16.msra.mxu0 %v66
  %89 = vmatprep.subr.bf16.mxu0 0
  %90 = vmatpush1.bf16.msra.mxu0 %v67
  %91 = vmatprep.subr.bf16.mxu0 0
  %92 = vmatpush1.bf16.msra.mxu0 %v68
  %93 = vmatprep.subr.bf16.mxu0 0
  %94 = vmatpush1.bf16.msra.mxu0 0
  %95 = vmatprep.subr.bf16.mxu0 0
  %96 = vmatpush1.bf16.msra.mxu0 0
  %97 = vmatprep.subr.bf16.mxu0 0
  %98 = vmatpush1.bf16.msra.mxu0 0
  %99 = vmatprep.subr.bf16.mxu0 0
  %100 = vmatpush1.bf16.msra.mxu0 0
  %101 = vmatprep.subr.bf16.mxu0 0
  %102 = vmatpush1.bf16.msra.mxu0 0
  %103 = vmatprep.subr.bf16.mxu0 0
  %104 = vmatpush1.bf16.msra.mxu0 0
  %105 = vmatprep.subr.bf16.mxu0 0
  %106 = vmatpush1.bf16.msra.mxu0 0
  %107 = vmatprep.subr.bf16.mxu0 0
  %108 = vmatpush1.bf16.msra.mxu0 0
  %109 = vmatprep.mubr.bf16.mxu0 0
  %110 = vmatmul.mubr.bf16.gmra.mrb[0].mxu0 %v12
  %v111 = vpop.f32.mrb[0].mxu0
  %v112 = vadd.f32 0.0, %v111
  %v113 = vpop.f32.mrb[0].mxu0
  %v114 = vpop.f32.mrb[0].mxu0
  %v115 = vpop.f32.mrb[0].mxu0
  %116 = vdwg.mxu0
  %v117 = vpack.c.bf16 %v112, %v112
  %118 = vst [vmem:[%s2] sm:$0xf] %v117
  // Predicated region
  $region10: #{gcn_layer.2} parent=0 // pred_check
    _
  $region11: #{gcn_layer.2} parent=0 // pred_check_branch
    %120 = sbr.rel (0) target = $region13
  $region12: #{gcn_layer.2} parent=0 // pred_region
    _
  $region13: #{gcn_layer.2} parent=0 // pred_fallthru
    _
  // Predicated region
  $region14: #{gcn_layer.2} parent=0 // pred_check
    _
  $region15: #{gcn_layer.2} parent=0 // pred_check_branch
    %122 = sbr.rel (0) target = $region17
  $region16: #{gcn_layer.2} parent=0 // pred_region
    _
  $region17: #{gcn_layer.2} parent=0 // pred_fallthru
    _

// kernel: gcn_layer.3
$region0: #{gcn_layer.3}
  #allocation0 [shape = 'u32[]', space=smem, size = 0x4, offset = 0x4, fixed_abs, tag = 'smem constant byte address 0x4 - core index']
  #allocation1 [shape = 'u32[144,128]{1,0:T(1,128)}', space=vmem, size = 0x12000, scoped, tag = 'internal scratch']
  %s0 = inlined_call_operand.vmem [shape: bf16[8,128], index: 0, kind: input, shape index: {}]
  %s1 = inlined_call_operand.vmem [shape: bf16[128,128], index: 1, kind: input, shape index: {}]
  %s2 = inlined_call_operand.vmem [shape: f32[8,128], index: 2, kind: output, shape index: {}]
  %s3 = sld [smem:[#allocation0]]
  $region18: #{gcn_layer.3} parent=0
    _
  %s5 = ssub.s32 1, %s3
  %s6 = scalar_select 0, %s5, %s3
  // Predicated region
  $region2: #{gcn_layer.3} parent=0 // pred_check
    _
  $region3: #{gcn_layer.3} parent=0 // pred_check_branch
    %8 = sbr.rel (0) target = $region5
  $region4: #{gcn_layer.3} parent=0 // pred_region
    _
  $region5: #{gcn_layer.3} parent=0 // pred_fallthru
    _
  // Predicated region
  $region6: #{gcn_layer.3} parent=0 // pred_check
    _
  $region7: #{gcn_layer.3} parent=0 // pred_check_branch
    %10 = sbr.rel (0) target = $region9
  $region8: #{gcn_layer.3} parent=0 // pred_region
    _
  $region9: #{gcn_layer.3} parent=0 // pred_fallthru
    _
  %v12 = vld [vmem:[%s0] sm:$0xf]
  %v13 = vld [vmem:[%s1] sm:$0xf]
  %v14 = vld [vmem:[%s1 + $0x4] sm:$0xf]
  %v15 = vld [vmem:[%s1 + $0x8] sm:$0xf]
  %v16 = vld [vmem:[%s1 + $0xc] sm:$0xf]
  %v17 = vld [vmem:[%s1 + $0x10] sm:$0xf]
  %v18 = vld [vmem:[%s1 + $0x14] sm:$0xf]
  %v19 = vld [vmem:[%s1 + $0x18] sm:$0xf]
  %v20 = vld [vmem:[%s1 + $0x1c] sm:$0xf]
  %v21 = vld [vmem:[%s1 + $0x20] sm:$0xf]
  %v22 = vld [vmem:[%s1 + $0x24] sm:$0xf]
  %v23 = vld [vmem:[%s1 + $0x28] sm:$0xf]
  %v24 = vld [vmem:[%s1 + $0x2c] sm:$0xf]
  %v25 = vld [vmem:[%s1 + $0x30] sm:$0xf]
  %v26 = vld [vmem:[%s1 + $0x34] sm:$0xf]
  %v27 = vld [vmem:[%s1 + $0x38] sm:$0xf]
  %v28 = vld [vmem:[%s1 + $0x3c] sm:$0xf]
  %v45 = vunpack.c.l.b16 %v13
  %v46 = vunpack.c.l.b16 %v14
  %v47 = vunpack.c.l.b16 %v15
  %v48 = vunpack.c.l.b16 %v16
  %v49 = vunpack.c.l.b16 %v17
  %v50 = vunpack.c.l.b16 %v18
  %v51 = vunpack.c.l.b16 %v19
  %v52 = vunpack.c.l.b16 %v20
  %v53 = vunpack.c.l.b16 %v21
  %v54 = vunpack.c.l.b16 %v22
  %v55 = vunpack.c.l.b16 %v23
  %v56 = vunpack.c.l.b16 %v24
  %v57 = vunpack.c.l.b16 %v25
  %v58 = vunpack.c.l.b16 %v26
  %v59 = vunpack.c.l.b16 %v27
  %v60 = vunpack.c.l.b16 %v28
  %v61 = vpack.c.b16 %v46, %v45
  %v62 = vpack.c.b16 %v48, %v47
  %v63 = vpack.c.b16 %v50, %v49
  %v64 = vpack.c.b16 %v52, %v51
  %v65 = vpack.c.b16 %v54, %v53
  %v66 = vpack.c.b16 %v56, %v55
  %v67 = vpack.c.b16 %v58, %v57
  %v68 = vpack.c.b16 %v60, %v59
  %77 = vmatprep.subr.bf16.mxu0 0
  %78 = vmatpush1.bf16.msra.mxu0 %v61
  %79 = vmatprep.subr.bf16.mxu0 0
  %80 = vmatpush1.bf16.msra.mxu0 %v62
  %81 = vmatprep.subr.bf16.mxu0 0
  %82 = vmatpush1.bf16.msra.mxu0 %v63
  %83 = vmatprep.subr.bf16.mxu0 0
  %84 = vmatpush1.bf16.msra.mxu0 %v64
  %85 = vmatprep.subr.bf16.mxu0 0
  %86 = vmatpush1.bf16.msra.mxu0 %v65
  %87 = vmatprep.subr.bf16.mxu0 0
  %88 = vmatpush1.bf16.msra.mxu0 %v66
  %89 = vmatprep.subr.bf16.mxu0 0
  %90 = vmatpush1.bf16.msra.mxu0 %v67
  %91 = vmatprep.subr.bf16.mxu0 0
  %92 = vmatpush1.bf16.msra.mxu0 %v68
  %93 = vmatprep.subr.bf16.mxu0 0
  %94 = vmatpush1.bf16.msra.mxu0 0
  %95 = vmatprep.subr.bf16.mxu0 0
  %96 = vmatpush1.bf16.msra.mxu0 0
  %97 = vmatprep.subr.bf16.mxu0 0
  %98 = vmatpush1.bf16.msra.mxu0 0
  %99 = vmatprep.subr.bf16.mxu0 0
  %100 = vmatpush1.bf16.msra.mxu0 0
  %101 = vmatprep.subr.bf16.mxu0 0
  %102 = vmatpush1.bf16.msra.mxu0 0
  %103 = vmatprep.subr.bf16.mxu0 0
  %104 = vmatpush1.bf16.msra.mxu0 0
  %105 = vmatprep.subr.bf16.mxu0 0
  %106 = vmatpush1.bf16.msra.mxu0 0
  %107 = vmatprep.subr.bf16.mxu0 0
  %108 = vmatpush1.bf16.msra.mxu0 0
  %109 = vmatprep.mubr.bf16.mxu0 0
  %110 = vmatmul.mubr.bf16.gmra.mrb[0].mxu0 %v12
  %v111 = vpop.f32.mrb[0].mxu0
  %v112 = vadd.f32 0.0, %v111
  %v113 = vpop.f32.mrb[0].mxu0
  %v114 = vpop.f32.mrb[0].mxu0
  %v115 = vpop.f32.mrb[0].mxu0
  %116 = vdwg.mxu0
  %117 = vst [vmem:[%s2] sm:$0xff] %v112
  // Predicated region
  $region10: #{gcn_layer.3} parent=0 // pred_check
    _
  $region11: #{gcn_layer.3} parent=0 // pred_check_branch
    %119 = sbr.rel (0) target = $region13
  $region12: #{gcn_layer.3} parent=0 // pred_region
    _
  $region13: #{gcn_layer.3} parent=0 // pred_fallthru
    _
  // Predicated region
  $region14: #{gcn_layer.3} parent=0 // pred_check
    _
  $region15: #{gcn_layer.3} parent=0 // pred_check_branch
    %121 = sbr.rel (0) target = $region17
  $region16: #{gcn_layer.3} parent=0 // pred_region
    _
  $region17: #{gcn_layer.3} parent=0 // pred_fallthru
    _

</llo_original>
